<compile_context>
chip_gen: v5e
topology: v5e:2x2
jax: 0.10.0
libtpu: 0.0.40
codegen_flags: <defaults>
</compile_context>

<pallas_src>
import functools

import jax
import jax.numpy as jnp
from jax.experimental import pallas as pl
from jax.experimental.pallas import tpu as pltpu

_HAS_BUFFERED = hasattr(pl, "Buffered")


def _round_up(x, m):
    return ((x + m - 1) // m) * m


def _vmem_capacity_bytes():
    """Physical VMEM of the current chip; conservative v7x default on failure."""
    try:
        info = pltpu.get_tpu_info()
        cap = int(getattr(info, "vmem_capacity_bytes", 0) or 0)
        if cap > 0:
            return cap
    except Exception:
        pass
    return 64 << 20  # smallest of v5e / v6e / v7x


def _w_blockspec(shape, index_map, single_buffer):
    # Resident weight with a constant block index is DMA'd once; Buffered(1)
    # additionally halves its VMEM footprint (second pipeline buffer unused).
    if single_buffer and _HAS_BUFFERED:
        try:
            return pl.BlockSpec(shape, index_map, pipeline_mode=pl.Buffered(1))
        except (TypeError, ValueError):
            pass
    return pl.BlockSpec(shape, index_map)


# --------------------------------------------------------------------------- #
# Kernels
# --------------------------------------------------------------------------- #
def _rb_kernel(x_ref, wt_ref, b_ref, o_ref, *, tn):
    # x_ref : (tb, Dp)  input row tile, full padded feature width resident
    # wt_ref: (Dp, tn)  columns of W^T  ->  MXU-native (K, N) operand
    # b_ref : (1, tn)   bias slice
    # o_ref : (tb, tn)  output tile
    j = pl.program_id(1)
    y = jnp.dot(x_ref[...], wt_ref[...], preferred_element_type=jnp.float32)
    col0 = pl.multiple_of(j * tn, 128)
    x_cols = x_ref[:, pl.ds(col0, tn)]
    # Fused epilogue: bias + relu + residual, single VPU chain, one store.
    o_ref[...] = (jnp.maximum(y + b_ref[...], 0.0) + x_cols).astype(o_ref.dtype)


def _rb_kernel_ktiled(x_ref, wt_ref, b_ref, xres_ref, o_ref, acc_ref):
    # K-tiled variant for very large D: f32 accumulator in VMEM scratch.
    k = pl.program_id(2)

    @pl.when(k == 0)
    def _():
        acc_ref[...] = jnp.zeros_like(acc_ref)

    acc_ref[...] += jnp.dot(x_ref[...], wt_ref[...],
                            preferred_element_type=jnp.float32)

    @pl.when(k == pl.num_programs(2) - 1)
    def _():
        o_ref[...] = (jnp.maximum(acc_ref[...] + b_ref[...], 0.0)
                      + xres_ref[...]).astype(o_ref.dtype)


# --------------------------------------------------------------------------- #
# Tiling plan
# --------------------------------------------------------------------------- #
def _plan_tiles(B, Dp, isz, budget, force_mode=None):
    """Pick (mode, tb, tn, tk) so all pipeline buffers fit in `budget` bytes."""
    batch_tiles = (256, 128, 64, 32, 16, 8)

    # 1) Resident W^T: whole (Dp, Dp) weight lives in VMEM, grid walks batch.
    if force_mode in (None, "resident"):
        for tb in batch_tiles:
            tbe = min(tb, B)
            xo_bytes = 4 * tbe * Dp * isz + 2 * Dp * isz     # x + out dbl-buf + bias
            if 2 * Dp * Dp * isz + xo_bytes <= budget or force_mode == "resident":
                return "resident", tbe, Dp, Dp               # W default double-buffered
            if _HAS_BUFFERED and Dp * Dp * isz + xo_bytes <= budget:
                return "resident1", tbe, Dp, Dp              # W single-buffered
            if tbe == B:
                break

    # 2) Streamed W^T column tiles (Dp, tn); x row tile keeps the full K width.
    #    Larger batch tile first: W HBM re-reads scale with ceil(B / tb).
    if force_mode in (None, "streamed"):
        for tb in (512,) + batch_tiles:
            tbe = min(tb, B)
            for tn in (256, 128):
                if Dp % tn:
                    continue
                need = 2 * isz * (tbe * Dp + Dp * tn + tn + tbe * tn)
                if need <= budget or force_mode == "streamed":
                    return "streamed", tbe, tn, Dp
            if tbe == B:
                break

    # 3) K-tiled (very large Dp, e.g. v7x's 64 MiB VMEM).
    tbe = min(256, B)
    tn = 256 if Dp % 256 == 0 else 128
    for nk in range(2, max(Dp // 128, 2) + 1):
        if Dp % nk == 0 and (Dp // nk) % 128 == 0:
            tk = Dp // nk
            need = 2 * isz * (tbe * tk + tk * tn + tn + 2 * tbe * tn) + 4 * tbe * tn
            if need <= budget:
                return "ktiled", tbe, tn, tk
    return "ktiled", tbe, tn, 128


def _vmem_need(mode, tb, tn, tk, Dp, isz):
    if mode == "resident":
        return 2 * Dp * Dp * isz + 4 * tb * Dp * isz + 2 * Dp * isz
    if mode == "resident1":
        return Dp * Dp * isz + 4 * tb * Dp * isz + 2 * Dp * isz
    if mode == "streamed":
        return 2 * isz * (tb * Dp + Dp * tn + tn + tb * tn)
    return 2 * isz * (tb * tk + tk * tn + tn + 2 * tb * tn) + 4 * tb * tn


# --------------------------------------------------------------------------- #
# Wrappers
# --------------------------------------------------------------------------- #
def prepare_residual_block_params(w, b):
    """Pad + transpose the static Linear params ONCE (outside the per-call path).

    w: (D, D) PyTorch nn.Linear weight (out_features, in_features);  b: (D,).
    Returns (wt_p, b2, D): W^T padded to (Dp, Dp), bias as (1, Dp), original D.
    """
    D = w.shape[0]
    assert w.shape == (D, D) and b.shape == (D,)
    Dp = _round_up(D, 128)
    wt = jnp.transpose(w)  # (in, out): contraction dim leading -> MXU-native RHS
    if Dp != D:
        wt = jnp.pad(wt, ((0, Dp - D), (0, Dp - D)))
        b = jnp.pad(b, (0, Dp - D))
    return wt, b.reshape(1, Dp), D


def residual_block_apply(x, wt_p, b2, d_feat, *, force_mode=None):
    """out = relu(x @ W^T + b) + x, with pre-prepared (padded, transposed) params."""
    orig_shape = x.shape
    assert orig_shape[-1] == d_feat
    x = x.reshape(-1, d_feat)
    B = x.shape[0]
    Dp = wt_p.shape[0]
    assert wt_p.shape == (Dp, Dp) and b2.shape == (1, Dp)

    x_p = jnp.pad(x, ((0, 0), (0, Dp - d_feat))) if Dp != d_feat else x

    isz = x.dtype.itemsize
    cap = _vmem_capacity_bytes()
    budget = int(cap * 0.85)
    mode, tb, tn, tk = _plan_tiles(B, Dp, isz, budget, force_mode=force_mode)

    need = _vmem_need(mode, tb, tn, tk, Dp, isz)
    vmem_limit = int(min(max(need + (8 << 20), 32 << 20), int(cap * 0.9)))

    cost = pl.CostEstimate(
        flops=2 * B * Dp * Dp,
        transcendentals=0,
        bytes_accessed=isz * (x_p.size + wt_p.size + b2.size + B * Dp),
    )

    if mode in ("resident", "resident1", "streamed"):
        nj = Dp // tn
        nb = -(-B // tb)
        # v7x has 2 TensorCores: make sure a parallel axis has >= 2 blocks
        # when the batch is large enough to split.
        if nb * nj == 1 and B >= 16:
            tb = max(8, _round_up((B + 1) // 2, 8))
            nb = -(-B // tb)
        out = pl.pallas_call(
            functools.partial(_rb_kernel, tn=tn),
            out_shape=jax.ShapeDtypeStruct((B, Dp), x.dtype),
            grid_spec=pltpu.PrefetchScalarGridSpec(
                num_scalar_prefetch=0,
                grid=(nb, nj),
                in_specs=[
                    pl.BlockSpec((tb, Dp), lambda i, j: (i, 0)),       # x row tile
                    _w_blockspec((Dp, tn), lambda i, j: (0, j),
                                 single_buffer=(mode == "resident1")),  # W^T cols
                    pl.BlockSpec((1, tn), lambda i, j: (0, j)),        # bias slice
                ],
                out_specs=pl.BlockSpec((tb, tn), lambda i, j: (i, j)),
            ),
            compiler_params=pltpu.CompilerParams(
                dimension_semantics=("parallel", "parallel"),
                vmem_limit_bytes=vmem_limit,
            ),
            cost_estimate=cost,
        )(x_p, wt_p, b2)
    else:  # "ktiled"
        nb = -(-B // tb)
        nj = Dp // tn
        nk = Dp // tk
        out = pl.pallas_call(
            _rb_kernel_ktiled,
            out_shape=jax.ShapeDtypeStruct((B, Dp), x.dtype),
            grid_spec=pltpu.PrefetchScalarGridSpec(
                num_scalar_prefetch=0,
                grid=(nb, nj, nk),
                in_specs=[
                    pl.BlockSpec((tb, tk), lambda i, j, k: (i, k)),    # x K tile
                    pl.BlockSpec((tk, tn), lambda i, j, k: (k, j)),    # W^T tile
                    pl.BlockSpec((1, tn), lambda i, j, k: (0, j)),     # bias slice
                    pl.BlockSpec((tb, tn), lambda i, j, k: (i, j)),    # residual cols
                ],
                out_specs=pl.BlockSpec((tb, tn), lambda i, j, k: (i, j)),
                scratch_shapes=[pltpu.VMEM((tb, tn), jnp.float32)],
            ),
            compiler_params=pltpu.CompilerParams(
                dimension_semantics=("parallel", "parallel", "arbitrary"),
                vmem_limit_bytes=vmem_limit,
            ),
            cost_estimate=cost,
        )(x_p, wt_p, b2, x_p)

    if Dp != d_feat:
        out = out[:, :d_feat]
    return out.reshape(orig_shape)


def residual_block(x, w, b, *, force_mode=None):
    """Convenience wrapper: out = relu(x @ w.T + b) + x (pads params per call)."""
    wt_p, b2, D = prepare_residual_block_params(w, b)
    return residual_block_apply(x, wt_p, b2, D, force_mode=force_mode)


def residual_block_ref(x, w, b):
    return jnp.maximum(x @ w.T + b, 0.0) + x


# --------------------------------------------------------------------------- #
if __name__ == "__main__":
    key = jax.random.PRNGKey(0)
    kx, kw, kb = jax.random.split(key, 3)

    # Small shapes consistent with the module: batch=8, dim=32 (padded to 128).
    B, D = 8, 32
    x = jax.random.normal(kx, (B, D), dtype=jnp.float32)
    bound = 1.0 / jnp.sqrt(jnp.float32(D))
    w = jax.random.uniform(kw, (D, D), minval=-bound, maxval=bound, dtype=jnp.float32)
    b = jax.random.uniform(kb, (D,), minval=-bound, maxval=bound, dtype=jnp.float32)

    wt_p, b2, d = prepare_residual_block_params(w, b)   # one-time param prep
    out = jax.block_until_ready(residual_block_apply(x, wt_p, b2, d))
    ref = residual_block_ref(x, w, b)
    assert out.shape == (B, D)
    assert jnp.allclose(out, ref, atol=1e-5, rtol=1e-5), "mismatch (default path)"

    # Also exercise the streamed-W and K-tiled code paths at small shapes.
    B2, D2 = 16, 384
    kx2, kw2, kb2 = jax.random.split(jax.random.PRNGKey(1), 3)
    x2 = jax.random.normal(kx2, (B2, D2), dtype=jnp.float32)
    bound2 = 1.0 / jnp.sqrt(jnp.float32(D2))
    w2 = jax.random.uniform(kw2, (D2, D2), minval=-bound2, maxval=bound2, dtype=jnp.float32)
    b2v = jax.random.uniform(kb2, (D2,), minval=-bound2, maxval=bound2, dtype=jnp.float32)
    ref2 = residual_block_ref(x2, w2, b2v)
    for mode in ("streamed", "ktiled"):
        got = jax.block_until_ready(residual_block(x2, w2, b2v, force_mode=mode))
        assert got.shape == (B2, D2)
        assert jnp.allclose(got, ref2, atol=1e-4, rtol=1e-4), f"mismatch ({mode})"

    print("KERNEL_OK")
</pallas_src>

<mosaic_0001>
module attributes {stable_mosaic.version = 11 : i64} {
  func.func @_rb_kernel(%arg0: i32, %arg1: i32, %arg2: memref<8x128xf32, #tpu.memory_space<vmem>>, %arg3: memref<128x128xf32, #tpu.memory_space<vmem>>, %arg4: memref<1x128xf32, #tpu.memory_space<vmem>>, %arg5: memref<8x128xf32, #tpu.memory_space<vmem>>) attributes {dimension_semantics = [#tpu.dimension_semantics<parallel>, #tpu.dimension_semantics<parallel>], iteration_bounds = array<i64: 1, 1>, scalar_prefetch = 0 : i64, scratch_operands = 0 : i64, tpu.core_type = #tpu.core_type<tc>, window_params = [{transform_indices = @transform_0, window_bounds = array<i64: 8, 128>}, {transform_indices = @transform_1, window_bounds = array<i64: 128, 128>}, {transform_indices = @transform_2, window_bounds = array<i64: 1, 128>}, {transform_indices = @transform_3, window_bounds = array<i64: 8, 128>}]} {
    %c0 = arith.constant 0 : index
    %c0_0 = arith.constant 0 : index
    %0 = vector.load %arg2[%c0, %c0_0] : memref<8x128xf32, #tpu.memory_space<vmem>>, vector<8x128xf32>
    %c0_1 = arith.constant 0 : index
    %c0_2 = arith.constant 0 : index
    %1 = vector.load %arg3[%c0_1, %c0_2] : memref<128x128xf32, #tpu.memory_space<vmem>>, vector<128x128xf32>
    %cst = arith.constant dense<0.000000e+00> : vector<8x128xf32>
    %2 = tpu.matmul %0, %1, %cst {dimension_numbers = #tpu.dot_dimension_numbers<[1], [0], [0], [1], [0, 0, 1, 1], [], []>} : vector<8x128xf32>, vector<128x128xf32>, vector<8x128xf32> -> vector<8x128xf32>
    %c128_i32 = arith.constant 128 : i32
    %3 = arith.muli %arg1, %c128_i32 : i32
    %4 = tpu.assume_multiple %3, 128 : i32
    %c0_3 = arith.constant 0 : index
    %5 = arith.index_cast %4 : i32 to index
    %6 = vector.load %arg2[%c0_3, %5] : memref<8x128xf32, #tpu.memory_space<vmem>>, vector<8x128xf32>
    %c0_4 = arith.constant 0 : index
    %c0_5 = arith.constant 0 : index
    %7 = vector.load %arg4[%c0_4, %c0_5] : memref<1x128xf32, #tpu.memory_space<vmem>>, vector<1x128xf32>
    %8 = vector.broadcast %7 : vector<1x128xf32> to vector<8x128xf32>
    %9 = arith.addf %2, %8 : vector<8x128xf32>
    %cst_6 = arith.constant 0.000000e+00 : f32
    %10 = vector.broadcast %cst_6 : f32 to vector<8x128xf32>
    %11 = arith.maximumf %9, %10 : vector<8x128xf32>
    %12 = arith.addf %11, %6 : vector<8x128xf32>
    %c0_7 = arith.constant 0 : index
    %c0_8 = arith.constant 0 : index
    %13 = vector.load %arg5[%c0_7, %c0_8] : memref<8x128xf32, #tpu.memory_space<vmem>>, vector<8x128xf32>
    tpu.vector_store %arg5[%c0_7, %c0_8], %12 {strides = array<i32>} : memref<8x128xf32, #tpu.memory_space<vmem>>, vector<8x128xf32>,
    return
  }
  func.func @transform_0(%arg0: i32, %arg1: i32) -> (i32, i32) {
    %c0_i32 = arith.constant 0 : i32
    %c0_i32_0 = arith.constant 0 : i32
    return %arg0, %c0_i32 : i32, i32
  }
  func.func @transform_1(%arg0: i32, %arg1: i32) -> (i32, i32) {
    %c0_i32 = arith.constant 0 : i32
    %c0_i32_0 = arith.constant 0 : i32
    return %c0_i32, %arg1 : i32, i32
  }
  func.func @transform_2(%arg0: i32, %arg1: i32) -> (i32, i32) {
    %c0_i32 = arith.constant 0 : i32
    %c0_i32_0 = arith.constant 0 : i32
    return %c0_i32, %arg1 : i32, i32
  }
  func.func @transform_3(%arg0: i32, %arg1: i32) -> (i32, i32) {
    %c0_i32 = arith.constant 0 : i32
    return %arg0, %arg1 : i32, i32
  }
}

</mosaic_0001>

<llo_original>
// kernel: tpu_custom_call.1
$region0: #{tpu_custom_call.1}
  #allocation0 [shape = 'u32[]', space=smem, size = 0x4, offset = 0x4, fixed_abs, tag = 'smem constant byte address 0x4 - core index']
  #allocation1 [shape = 'u32[72,128]{1,0:T(1,128)}', space=vmem, size = 0x9000, scoped, tag = 'internal scratch']
  %s0 = inlined_call_operand.hbm [shape: f32[8,128], index: 0, kind: input, shape index: {}]
  %s1 = inlined_call_operand.hbm [shape: f32[128,128], index: 1, kind: input, shape index: {}]
  %s2 = inlined_call_operand.vmem [shape: f32[1,128], index: 2, kind: input, shape index: {}]
  %s3 = inlined_call_operand.hbm [shape: f32[8,128], index: 3, kind: output, shape index: {}]
  %s4 = sld [smem:[#allocation0]]
  $region30: #{tpu_custom_call.1} parent=0
    _
  %s6 = ssub.s32 1, %s4
  %s7 = scalar_select 0, %s6, %s4
  $region1: #{tpu_custom_call.1} parent=0
    #allocation2 [shape = 'u8[4096]{0}', space=vmem, size = 0x1000, scoped, tag = 'input window, operand 0, single buffered']
    #allocation3 [shape = 's32[1]{0}', space=sflag, size = 0x4, scoped, tag = 'scoped memory for tpu_custom_call.1']
    #allocation4 [shape = 's32[1]{0}', space=sflag, size = 0x4, scoped, tag = 'scoped memory for tpu_custom_call.1']
    #allocation5 [shape = 'u8[65536]{0}', space=vmem, size = 0x10000, scoped, tag = 'input window, operand 1, single buffered']
    #allocation6 [shape = 's32[1]{0}', space=sflag, size = 0x4, scoped, tag = 'scoped memory for tpu_custom_call.1']
    #allocation7 [shape = 'u8[4096]{0}', space=vmem, size = 0x1000, scoped, tag = 'output window, operand 0, single buffered']
    %8 = vsyncpa [#allocation3], 0
    %9 = vsyncpa [#allocation6], 0
    %10 = vsyncpa [#allocation4], 0
    // Predicated region
    $region2: #{tpu_custom_call.1} parent=1 // pred_check
      _
    $region3: #{tpu_custom_call.1} parent=1 // pred_check_branch
      %12 = sbr.rel (0) target = $region5
    $region4: #{tpu_custom_call.1} parent=1 // pred_region
      %14 = vsyncadd [#allocation3], 0
      %s16 = sshll.u32 %s0, 4
      %s17 = int_to_ptr.hbm [resolvable:$true] %s16
      %s18 = sshll.u32 [#allocation2], 4
      %s19 = int_to_ptr.vmem [resolvable:$true] %s18
      %21 = dma.hbm_to_vmem [thread:$0]  %s17, 128, %s19, [#allocation3]
    $region5: #{tpu_custom_call.1} parent=1 // pred_fallthru
      _
    // Predicated region
    $region6: #{tpu_custom_call.1} parent=1 // pred_check
      _
    $region7: #{tpu_custom_call.1} parent=1 // pred_check_branch
      %23 = sbr.rel (0) target = $region9
    $region8: #{tpu_custom_call.1} parent=1 // pred_region
      %25 = vsyncadd [#allocation6], 0
      %s26 = sshll.u32 %s1, 4
      %s27 = int_to_ptr.hbm [resolvable:$true] %s26
      %s28 = sshll.u32 [#allocation5], 4
      %s29 = int_to_ptr.vmem [resolvable:$true] %s28
      %34 = dma.hbm_to_vmem [thread:$0]  %s27, 2048, %s29, [#allocation6], 128, 128, 8
    $region9: #{tpu_custom_call.1} parent=1 // pred_fallthru
      _
    // Predicated region
    $region10: #{tpu_custom_call.1} parent=1 // pred_check
      _
    $region11: #{tpu_custom_call.1} parent=1 // pred_check_branch
      %36 = sbr.rel (0) target = $region13
    $region12: #{tpu_custom_call.1} parent=1 // pred_region
      _
    $region13: #{tpu_custom_call.1} parent=1 // pred_fallthru
      _
    // Predicated region
    $region14: #{tpu_custom_call.1} parent=1 // pred_check
      _
    $region15: #{tpu_custom_call.1} parent=1 // pred_check_branch
      %38 = sbr.rel (0) target = $region17
    $region16: #{tpu_custom_call.1} parent=1 // pred_region
      %40 = dma.done [#allocation3], 128
    $region17: #{tpu_custom_call.1} parent=1 // pred_fallthru
      _
    // Predicated region
    $region18: #{tpu_custom_call.1} parent=1 // pred_check
      _
    $region19: #{tpu_custom_call.1} parent=1 // pred_check_branch
      %42 = sbr.rel (0) target = $region21
    $region20: #{tpu_custom_call.1} parent=1 // pred_region
      %44 = dma.done [#allocation6], 2048
    $region21: #{tpu_custom_call.1} parent=1 // pred_fallthru
      _
    %v45 = vld [vmem:[#allocation2] sm:$0xff]
    %v46 = vld [vmem:[#allocation5] sm:$0xff]
    %v47 = vld [vmem:[#allocation5 + $0x8] sm:$0xff]
    %v48 = vld [vmem:[#allocation5 + $0x10] sm:$0xff]
    %v49 = vld [vmem:[#allocation5 + $0x18] sm:$0xff]
    %v50 = vld [vmem:[#allocation5 + $0x20] sm:$0xff]
    %v51 = vld [vmem:[#allocation5 + $0x28] sm:$0xff]
    %v52 = vld [vmem:[#allocation5 + $0x30] sm:$0xff]
    %v53 = vld [vmem:[#allocation5 + $0x38] sm:$0xff]
    %v54 = vld [vmem:[#allocation5 + $0x40] sm:$0xff]
    %v55 = vld [vmem:[#allocation5 + $0x48] sm:$0xff]
    %v56 = vld [vmem:[#allocation5 + $0x50] sm:$0xff]
    %v57 = vld [vmem:[#allocation5 + $0x58] sm:$0xff]
    %v58 = vld [vmem:[#allocation5 + $0x60] sm:$0xff]
    %v59 = vld [vmem:[#allocation5 + $0x68] sm:$0xff]
    %v60 = vld [vmem:[#allocation5 + $0x70] sm:$0xff]
    %v61 = vld [vmem:[#allocation5 + $0x78] sm:$0xff]
    %s62 = smul.u32 0, 128
    %s63 = sshra.s32 %s62, 7
    %s64 = sand.u32 %s62, 127
    %s65 = scalar_lea.vmem [#allocation2], %s63
    %v66 = vld [vmem:[%s65] sm:$0xff]
    %v67 = vld [vmem:[%s2] sm:$0x1]
    %v69 = vperm.slane %v67, 0
    %71 = vmatpush.msra.mxu0 %v61
    %72 = vmatpush.msra.mxu0 %v60
    %73 = vmatpush.msra.mxu0 %v59
    %74 = vmatpush.msra.mxu0 %v58
    %75 = vmatpush.msra.mxu0 %v57
    %76 = vmatpush.msra.mxu0 %v56
    %77 = vmatpush.msra.mxu0 %v55
    %78 = vmatpush.msra.mxu0 %v54
    %79 = vmatpush.msra.mxu0 %v53
    %80 = vmatpush.msra.mxu0 %v52
    %81 = vmatpush.msra.mxu0 %v51
    %82 = vmatpush.msra.mxu0 %v50
    %83 = vmatpush.msra.mxu0 %v49
    %84 = vmatpush.msra.mxu0 %v48
    %85 = vmatpush.msra.mxu0 %v47
    %86 = vmatpush.msra.mxu0 %v46
    %87 = vmatmul.f32.gmra.mxu0 %v45
    %v88 = vpop.f32.mrf.mxu0
    %v89 = vadd.f32 %v69, %v88
    %90 = vdwg.mxu0
    %v91 = vmax.f32 %v89, 0.0
    %v92 = vadd.f32 %v91, %v66
    %93 = vst [vmem:[#allocation7] sm:$0xff] %v92
    // Predicated region
    $region22: #{tpu_custom_call.1} parent=1 // pred_check
      _
    $region23: #{tpu_custom_call.1} parent=1 // pred_check_branch
      %95 = sbr.rel (0) target = $region25
    $region24: #{tpu_custom_call.1} parent=1 // pred_region
      %97 = vsyncadd [#allocation4], 0
      %s99 = sshll.u32 [#allocation7], 4
      %s100 = int_to_ptr.vmem [resolvable:$true] %s99
      %s101 = sshll.u32 %s3, 4
      %s102 = int_to_ptr.hbm [resolvable:$true] %s101
      %104 = dma.vmem_to_hbm [thread:$0]  %s100, 128, %s102, [#allocation4]
    $region25: #{tpu_custom_call.1} parent=1 // pred_fallthru
      _
    // Predicated region
    $region26: #{tpu_custom_call.1} parent=1 // pred_check
      _
    $region27: #{tpu_custom_call.1} parent=1 // pred_check_branch
      %106 = sbr.rel (0) target = $region29
    $region28: #{tpu_custom_call.1} parent=1 // pred_region
      %108 = dma.done [#allocation4], 128
    $region29: #{tpu_custom_call.1} parent=1 // pred_fallthru
      _
    %109 = vsyncpa [#allocation3], 1
    %110 = vsyncpa [#allocation6], 1
    %111 = vsyncpa [#allocation4], 1

</llo_original>
